<compile_context>
chip_gen: v7x
topology: tpu7x:2x2x1
jax: 0.10.0
libtpu: 0.0.40
codegen_flags: <defaults>
</compile_context>

<pallas_src>
import jax
import jax.numpy as jnp
from jax import lax
from jax.experimental import pallas as pl
from jax.experimental.pallas import tpu as pltpu


def _round_up(n: int, m: int) -> int:
    return ((n + m - 1) // m) * m


def critic_kernel(x_ref, w1_ref, b1_ref, w2_ref, b2_ref, w3_ref, b3_ref, o_ref):
    """One batch tile of the critic MLP, computed feature-major.

    x_ref : (TILE_B, in_dim)   activations for this batch tile (pipelined)
    w1_ref: (hidden, in_dim)   fc1 weight, PyTorch layout (out, in)
    b1_ref: (hidden, 1)        fc1 bias (column)
    w2_ref: (hidden, hidden)   fc2 weight
    b2_ref: (hidden, 1)        fc2 bias (column)
    w3_ref: (hidden, 1)        fc3 weight as a column vector
    b3_ref: (1, 1) in SMEM     fc3 bias scalar
    o_ref : (1, 1, TILE_B)     lane-dense output slab for this tile
    """
    x = x_ref[...]                                             # (TILE_B, in_dim)

    # h1^T = W1 @ x^T  -> (hidden, TILE_B); contract in_dim of both operands.
    h1 = lax.dot_general(
        w1_ref[...], x, (((1,), (1,)), ((), ())),
        preferred_element_type=jnp.float32)
    h1 = jnp.maximum(h1 + b1_ref[...], 0.0)

    # h2^T = W2 @ h1^T -> (hidden, TILE_B)
    h2 = jnp.dot(w2_ref[...], h1, preferred_element_type=jnp.float32)
    h2 = jnp.maximum(h2 + b2_ref[...], 0.0)

    # fc3 (out_features = 1): VPU multiply + sublane (XLU) reduce, lane-dense result.
    out = jnp.sum(h2 * w3_ref[...], axis=0, keepdims=True) + b3_ref[0, 0]  # (1, TILE_B)

    o_ref[...] = out[None].astype(o_ref.dtype)                 # (1, 1, TILE_B)


@jax.jit
def critic_forward(x, w1, b1, w2, b2, w3, b3):
    """Critic forward pass. Weights/biases in PyTorch nn.Linear layout:
    w: (out_features, in_features), b: (out_features,). Returns (batch, 1)."""
    batch, in_dim = x.shape
    hidden = w1.shape[0]

    # Batch tile: lane-dense multiple of 128, capped at 1024 (double-buffered in VMEM).
    tile_b = min(1024, _round_up(batch, 128))
    num_blocks = pl.cdiv(batch, tile_b)
    padded = num_blocks * tile_b
    if padded != batch:
        x = jnp.pad(x, ((0, padded - batch), (0, 0)))

    b1c = b1.reshape(hidden, 1)
    b2c = b2.reshape(hidden, 1)
    w3c = w3.reshape(hidden, 1)          # (1, hidden) -> column vector
    b3s = b3.reshape(1, 1)               # scalar, goes to SMEM

    flops = 2 * padded * (in_dim * hidden + hidden * hidden + hidden)
    bytes_accessed = 4 * (padded * in_dim + padded
                          + hidden * in_dim + hidden * hidden + 3 * hidden + 1)

    out = pl.pallas_call(
        critic_kernel,
        out_shape=jax.ShapeDtypeStruct((num_blocks, 1, tile_b), jnp.float32),
        grid=(num_blocks,),
        in_specs=[
            pl.BlockSpec((tile_b, in_dim), lambda i: (i, 0)),   # x: pipelined batch tiles
            pl.BlockSpec(memory_space=pltpu.VMEM),              # w1 (resident, untiled)
            pl.BlockSpec(memory_space=pltpu.VMEM),              # b1
            pl.BlockSpec(memory_space=pltpu.VMEM),              # w2
            pl.BlockSpec(memory_space=pltpu.VMEM),              # b2
            pl.BlockSpec(memory_space=pltpu.VMEM),              # w3 column
            pl.BlockSpec(memory_space=pltpu.SMEM),              # b3 scalar
        ],
        out_specs=pl.BlockSpec((1, 1, tile_b), lambda i: (i, 0, 0)),
        compiler_params=pltpu.CompilerParams(
            dimension_semantics=("parallel",),                  # shard batch over TCs (v7x)
            vmem_limit_bytes=32 * 1024 * 1024,                  # explicit; safe on 64 MiB v7x
        ),
        cost_estimate=pl.CostEstimate(
            flops=flops, transcendentals=0, bytes_accessed=bytes_accessed),
    )(x, w1, b1c, w2, b2c, w3c, b3s)

    # (num_blocks, 1, tile_b) -> (padded, 1) row order, then drop batch padding.
    return out.reshape(padded, 1)[:batch]


def init_critic_params(key, input_dim, hidden_dim=24):
    """PyTorch-style nn.Linear init: U(-1/sqrt(fan_in), 1/sqrt(fan_in)), (out, in) layout."""
    ks = jax.random.split(key, 6)

    def linear(kw, kb, fan_in, fan_out):
        bound = 1.0 / jnp.sqrt(jnp.float32(fan_in))
        w = jax.random.uniform(kw, (fan_out, fan_in), jnp.float32, -bound, bound)
        b = jax.random.uniform(kb, (fan_out,), jnp.float32, -bound, bound)
        return w, b

    w1, b1 = linear(ks[0], ks[1], input_dim, hidden_dim)
    w2, b2 = linear(ks[2], ks[3], hidden_dim, hidden_dim)
    w3, b3 = linear(ks[4], ks[5], hidden_dim, 1)
    return w1, b1, w2, b2, w3, b3


def critic_reference(x, w1, b1, w2, b2, w3, b3):
    h1 = jnp.maximum(x @ w1.T + b1, 0.0)
    h2 = jnp.maximum(h1 @ w2.T + b2, 0.0)
    # fc3 (out_features == 1) written as an explicit dot product so both reference and
    # kernel use full-f32 elementwise math for the last layer (same semantics as h2 @ w3.T).
    return jnp.sum(h2 * w3[0], axis=-1, keepdims=True) + b3


if __name__ == "__main__":
    key = jax.random.PRNGKey(0)
    k_params, k_x = jax.random.split(key)

    batch, input_dim, hidden_dim = 8, 4, 24
    params = init_critic_params(k_params, input_dim, hidden_dim)
    x = jax.random.normal(k_x, (batch, input_dim), jnp.float32)

    out = critic_forward(x, *params)
    jax.block_until_ready(out)

    ref = critic_reference(x, *params)
    assert out.shape == (batch, 1), out.shape
    assert jnp.allclose(out, ref, atol=1e-4, rtol=1e-4), "mismatch vs reference"

    print("KERNEL_OK")
</pallas_src>

<mosaic_0001>
module attributes {stable_mosaic.version = 11 : i64} {
  func.func @critic_kernel(%arg0: i32, %arg1: memref<128x4xf32, #tpu.memory_space<vmem>>, %arg2: memref<24x4xf32, #tpu.memory_space<vmem>>, %arg3: memref<24x1xf32, #tpu.memory_space<vmem>>, %arg4: memref<24x24xf32, #tpu.memory_space<vmem>>, %arg5: memref<24x1xf32, #tpu.memory_space<vmem>>, %arg6: memref<24x1xf32, #tpu.memory_space<vmem>>, %arg7: memref<1x1xf32, #tpu.memory_space<smem>>, %arg8: memref<1x1x128xf32, #tpu.memory_space<vmem>>) attributes {dimension_semantics = [#tpu.dimension_semantics<parallel>], iteration_bounds = array<i64: 1>, scalar_prefetch = 0 : i64, scratch_operands = 0 : i64, tpu.core_type = #tpu.core_type<tc>, window_params = [{transform_indices = @transform_0, window_bounds = array<i64: 128, 4>}, {pipeline_mode = #tpu.pipeline_mode<synchronous>, transform_indices = @transform_1, window_bounds = array<i64: 24, 4>}, {pipeline_mode = #tpu.pipeline_mode<synchronous>, transform_indices = @transform_2, window_bounds = array<i64: 24, 1>}, {pipeline_mode = #tpu.pipeline_mode<synchronous>, transform_indices = @transform_3, window_bounds = array<i64: 24, 24>}, {pipeline_mode = #tpu.pipeline_mode<synchronous>, transform_indices = @transform_4, window_bounds = array<i64: 24, 1>}, {pipeline_mode = #tpu.pipeline_mode<synchronous>, transform_indices = @transform_5, window_bounds = array<i64: 24, 1>}, {transform_indices = @transform_6, window_bounds = array<i64: 1, 1>}, {transform_indices = @transform_7, window_bounds = array<i64: 1, 1, 128>}]} {
    %c0 = arith.constant 0 : index
    %c0_0 = arith.constant 0 : index
    %0 = vector.load %arg1[%c0, %c0_0] : memref<128x4xf32, #tpu.memory_space<vmem>>, vector<128x4xf32>
    %c0_1 = arith.constant 0 : index
    %c0_2 = arith.constant 0 : index
    %1 = vector.load %arg2[%c0_1, %c0_2] : memref<24x4xf32, #tpu.memory_space<vmem>>, vector<24x4xf32>
    %cst = arith.constant dense<0.000000e+00> : vector<24x128xf32>
    %2 = tpu.matmul %1, %0, %cst {dimension_numbers = #tpu.dot_dimension_numbers<[1], [1], [0], [0], [0, 0, 1, 0], [], []>} : vector<24x4xf32>, vector<128x4xf32>, vector<24x128xf32> -> vector<24x128xf32>
    %c0_3 = arith.constant 0 : index
    %c0_4 = arith.constant 0 : index
    %3 = vector.load %arg3[%c0_3, %c0_4] : memref<24x1xf32, #tpu.memory_space<vmem>>, vector<24x1xf32>
    %4 = vector.broadcast %3 : vector<24x1xf32> to vector<24x128xf32>
    %5 = arith.addf %2, %4 : vector<24x128xf32>
    %cst_5 = arith.constant 0.000000e+00 : f32
    %6 = vector.broadcast %cst_5 : f32 to vector<24x128xf32>
    %7 = arith.maximumf %5, %6 : vector<24x128xf32>
    %c0_6 = arith.constant 0 : index
    %c0_7 = arith.constant 0 : index
    %8 = vector.load %arg4[%c0_6, %c0_7] : memref<24x24xf32, #tpu.memory_space<vmem>>, vector<24x24xf32>
    %cst_8 = arith.constant dense<0.000000e+00> : vector<24x128xf32>
    %9 = tpu.matmul %8, %7, %cst_8 {dimension_numbers = #tpu.dot_dimension_numbers<[1], [0], [0], [1], [0, 0, 1, 1], [], []>} : vector<24x24xf32>, vector<24x128xf32>, vector<24x128xf32> -> vector<24x128xf32>
    %c0_9 = arith.constant 0 : index
    %c0_10 = arith.constant 0 : index
    %10 = vector.load %arg5[%c0_9, %c0_10] : memref<24x1xf32, #tpu.memory_space<vmem>>, vector<24x1xf32>
    %11 = vector.broadcast %10 : vector<24x1xf32> to vector<24x128xf32>
    %12 = arith.addf %9, %11 : vector<24x128xf32>
    %cst_11 = arith.constant 0.000000e+00 : f32
    %13 = vector.broadcast %cst_11 : f32 to vector<24x128xf32>
    %14 = arith.maximumf %12, %13 : vector<24x128xf32>
    %c0_12 = arith.constant 0 : index
    %c0_13 = arith.constant 0 : index
    %15 = vector.load %arg6[%c0_12, %c0_13] : memref<24x1xf32, #tpu.memory_space<vmem>>, vector<24x1xf32>
    %16 = vector.broadcast %15 : vector<24x1xf32> to vector<24x128xf32>
    %17 = arith.mulf %14, %16 : vector<24x128xf32>
    %cst_14 = arith.constant dense<0.000000e+00> : vector<128xf32>
    %18 = vector.multi_reduction <add>, %17, %cst_14 [0] : vector<24x128xf32> to vector<128xf32>
    %19 = vector.shape_cast %18 : vector<128xf32> to vector<1x128xf32>
    %c0_15 = arith.constant 0 : index
    %c0_16 = arith.constant 0 : index
    %20 = memref.load %arg7[%c0_15, %c0_16] : memref<1x1xf32, #tpu.memory_space<smem>>
    %21 = vector.broadcast %20 : f32 to vector<1x128xf32>
    %22 = arith.addf %19, %21 : vector<1x128xf32>
    %23 = vector.shape_cast %22 : vector<1x128xf32> to vector<1x1x128xf32>
    %c0_17 = arith.constant 0 : index
    %c0_18 = arith.constant 0 : index
    %c0_19 = arith.constant 0 : index
    %24 = vector.load %arg8[%c0_17, %c0_18, %c0_19] : memref<1x1x128xf32, #tpu.memory_space<vmem>>, vector<1x1x128xf32>
    tpu.vector_store %arg8[%c0_17, %c0_18, %c0_19], %23 {strides = array<i32>} : memref<1x1x128xf32, #tpu.memory_space<vmem>>, vector<1x1x128xf32>,
    return
  }
  func.func @transform_0(%arg0: i32) -> (i32, i32) {
    %c0_i32 = arith.constant 0 : i32
    %c0_i32_0 = arith.constant 0 : i32
    return %arg0, %c0_i32 : i32, i32
  }
  func.func @transform_1(%arg0: i32) -> (i32, i32) {
    %c0_i32 = arith.constant 0 : i32
    %c0_i32_0 = arith.constant 0 : i32
    %c0_i32_1 = arith.constant 0 : i32
    return %c0_i32, %c0_i32_0 : i32, i32
  }
  func.func @transform_2(%arg0: i32) -> (i32, i32) {
    %c0_i32 = arith.constant 0 : i32
    %c0_i32_0 = arith.constant 0 : i32
    %c0_i32_1 = arith.constant 0 : i32
    return %c0_i32, %c0_i32_0 : i32, i32
  }
  func.func @transform_3(%arg0: i32) -> (i32, i32) {
    %c0_i32 = arith.constant 0 : i32
    %c0_i32_0 = arith.constant 0 : i32
    %c0_i32_1 = arith.constant 0 : i32
    return %c0_i32, %c0_i32_0 : i32, i32
  }
  func.func @transform_4(%arg0: i32) -> (i32, i32) {
    %c0_i32 = arith.constant 0 : i32
    %c0_i32_0 = arith.constant 0 : i32
    %c0_i32_1 = arith.constant 0 : i32
    return %c0_i32, %c0_i32_0 : i32, i32
  }
  func.func @transform_5(%arg0: i32) -> (i32, i32) {
    %c0_i32 = arith.constant 0 : i32
    %c0_i32_0 = arith.constant 0 : i32
    %c0_i32_1 = arith.constant 0 : i32
    return %c0_i32, %c0_i32_0 : i32, i32
  }
  func.func @transform_6(%arg0: i32) -> (i32, i32) {
    %c0_i32 = arith.constant 0 : i32
    %c0_i32_0 = arith.constant 0 : i32
    %c0_i32_1 = arith.constant 0 : i32
    return %c0_i32, %c0_i32_0 : i32, i32
  }
  func.func @transform_7(%arg0: i32) -> (i32, i32, i32) {
    %c0_i32 = arith.constant 0 : i32
    %c0_i32_0 = arith.constant 0 : i32
    %c0_i32_1 = arith.constant 0 : i32
    return %arg0, %c0_i32, %c0_i32_0 : i32, i32, i32
  }
}

</mosaic_0001>

<llo_original>
// kernel: critic_forward.1
$region0: #{critic_forward.1}
  #allocation0 [shape = 'u32[]', space=smem, size = 0x4, offset = 0x4, fixed_abs, tag = 'smem constant byte address 0x4 - core index']
  #allocation1 [shape = 'u32[144,128]{1,0:T(1,128)}', space=vmem, size = 0x12000, scoped, tag = 'internal scratch']
  #allocation2 [shape = 'f32[1,1]{1,0:T(1,128)S(6)}', space=smem, size = 0x200, scoped, tag = 'scoped memory for critic_forward.1']
  %s0 = inlined_call_operand.vmem [shape: f32[128,4], index: 0, kind: input, shape index: {}]
  %s1 = inlined_call_operand.vmem [shape: f32[24,4], index: 1, kind: input, shape index: {}]
  %s2 = inlined_call_operand.vmem [shape: f32[24,1], index: 2, kind: input, shape index: {}]
  %s3 = inlined_call_operand.vmem [shape: f32[24,24], index: 3, kind: input, shape index: {}]
  %s4 = inlined_call_operand.vmem [shape: f32[24,1], index: 4, kind: input, shape index: {}]
  %s5 = inlined_call_operand.vmem [shape: f32[24,1], index: 5, kind: input, shape index: {}]
  %s6 = inlined_call_operand.<no memory space> [shape: f32[1,1], index: 6, kind: input, shape index: {}]
  %s7 = inlined_call_operand.vmem [shape: f32[1,1,128], index: 7, kind: output, shape index: {}]
  %s8 = sld [smem:[#allocation0]]
  $region38: #{critic_forward.1} parent=0
    _
  %s10 = ssub.s32 1, %s8
  %s11 = scalar_select 0, %s10, %s8
  %12 = sst [smem:[#allocation2]] %s6
  // Predicated region
  $region2: #{critic_forward.1} parent=0 // pred_check
    _
  $region3: #{critic_forward.1} parent=0 // pred_check_branch
    %14 = sbr.rel (0) target = $region5
  $region4: #{critic_forward.1} parent=0 // pred_region
    _
  $region5: #{critic_forward.1} parent=0 // pred_fallthru
    _
  // Predicated region
  $region6: #{critic_forward.1} parent=0 // pred_check
    _
  $region7: #{critic_forward.1} parent=0 // pred_check_branch
    %16 = sbr.rel (0) target = $region9
  $region8: #{critic_forward.1} parent=0 // pred_region
    _
  $region9: #{critic_forward.1} parent=0 // pred_fallthru
    _
  // Predicated region
  $region10: #{critic_forward.1} parent=0 // pred_check
    _
  $region11: #{critic_forward.1} parent=0 // pred_check_branch
    %18 = sbr.rel (0) target = $region13
  $region12: #{critic_forward.1} parent=0 // pred_region
    _
  $region13: #{critic_forward.1} parent=0 // pred_fallthru
    _
  // Predicated region
  $region14: #{critic_forward.1} parent=0 // pred_check
    _
  $region15: #{critic_forward.1} parent=0 // pred_check_branch
    %20 = sbr.rel (0) target = $region17
  $region16: #{critic_forward.1} parent=0 // pred_region
    _
  $region17: #{critic_forward.1} parent=0 // pred_fallthru
    _
  // Predicated region
  $region18: #{critic_forward.1} parent=0 // pred_check
    _
  $region19: #{critic_forward.1} parent=0 // pred_check_branch
    %22 = sbr.rel (0) target = $region21
  $region20: #{critic_forward.1} parent=0 // pred_region
    _
  $region21: #{critic_forward.1} parent=0 // pred_fallthru
    _
  // Predicated region
  $region22: #{critic_forward.1} parent=0 // pred_check
    _
  $region23: #{critic_forward.1} parent=0 // pred_check_branch
    %24 = sbr.rel (0) target = $region25
  $region24: #{critic_forward.1} parent=0 // pred_region
    _
  $region25: #{critic_forward.1} parent=0 // pred_fallthru
    _
  // Predicated region
  $region26: #{critic_forward.1} parent=0 // pred_check
    _
  $region27: #{critic_forward.1} parent=0 // pred_check_branch
    %26 = sbr.rel (0) target = $region29
  $region28: #{critic_forward.1} parent=0 // pred_region
    _
  $region29: #{critic_forward.1} parent=0 // pred_fallthru
    _
  %v27 = vld [vmem:[%s0] sm:$0xff]
  %v28 = vld [vmem:[%s0 + $0x8] sm:$0xff]
  %v29 = vld [vmem:[%s0 + $0x10] sm:$0xff]
  %v30 = vld [vmem:[%s0 + $0x18] sm:$0xff]
  %v31 = vld [vmem:[%s0 + $0x20] sm:$0xff]
  %v32 = vld [vmem:[%s0 + $0x28] sm:$0xff]
  %v33 = vld [vmem:[%s0 + $0x30] sm:$0xff]
  %v34 = vld [vmem:[%s0 + $0x38] sm:$0xff]
  %v35 = vld [vmem:[%s0 + $0x40] sm:$0xff]
  %v36 = vld [vmem:[%s0 + $0x48] sm:$0xff]
  %v37 = vld [vmem:[%s0 + $0x50] sm:$0xff]
  %v38 = vld [vmem:[%s0 + $0x58] sm:$0xff]
  %v39 = vld [vmem:[%s0 + $0x60] sm:$0xff]
  %v40 = vld [vmem:[%s0 + $0x68] sm:$0xff]
  %v41 = vld [vmem:[%s0 + $0x70] sm:$0xff]
  %v42 = vld [vmem:[%s0 + $0x78] sm:$0xff]
  %v43 = vld [vmem:[%s1] sm:$0xff]
  %v44 = vld [vmem:[%s1 + $0x8] sm:$0xff]
  %v45 = vld [vmem:[%s1 + $0x10] sm:$0xff]
  %v46 = vld [vmem:[%s2] sm:$0xff]
  %v47 = vld [vmem:[%s2 + $0x8] sm:$0xff]
  %v48 = vld [vmem:[%s2 + $0x10] sm:$0xff]
  %50 = vset.pattern.permute.xlu0 0
  %51 = vperm.xlu0 %50, %v46
  %v52 = vpop.permute.xlu0 %51
  %55 = vset.pattern.permute.xlu0 0
  %56 = vperm.xlu0 %55, %v47
  %v57 = vpop.permute.xlu0 %56
  %60 = vset.pattern.permute.xlu0 0
  %61 = vperm.xlu0 %60, %v48
  %v62 = vpop.permute.xlu0 %61
  %vm64 = vcmask 31744
  %v66 = vsel %vm64, %v43, 0
  %v69 = vsel %vm64, %v44, 0
  %v72 = vsel %vm64, %v45, 0
  %v75 = vsel %vm64, %v27, 0
  %v78 = vsel %vm64, %v28, 0
  %v81 = vsel %vm64, %v29, 0
  %v84 = vsel %vm64, %v30, 0
  %v87 = vsel %vm64, %v31, 0
  %v90 = vsel %vm64, %v32, 0
  %v93 = vsel %vm64, %v33, 0
  %v96 = vsel %vm64, %v34, 0
  %v99 = vsel %vm64, %v35, 0
  %v102 = vsel %vm64, %v36, 0
  %v105 = vsel %vm64, %v37, 0
  %v108 = vsel %vm64, %v38, 0
  %v111 = vsel %vm64, %v39, 0
  %v114 = vsel %vm64, %v40, 0
  %v117 = vsel %vm64, %v41, 0
  %v120 = vsel %vm64, %v42, 0
  %122 = vmatprep.subr.mxu0 0.0
  %123 = vmatpush1.xpose.msra.mxu0 %v75
  %124 = vmatprep.subr.mxu0 0.0
  %125 = vmatpush1.xpose.msra.mxu0 %v78
  %126 = vmatprep.subr.mxu0 0.0
  %127 = vmatpush1.xpose.msra.mxu0 %v81
  %128 = vmatprep.subr.mxu0 0.0
  %129 = vmatpush1.xpose.msra.mxu0 %v84
  %130 = vmatprep.subr.mxu0 0.0
  %131 = vmatpush1.xpose.msra.mxu0 %v87
  %132 = vmatprep.subr.mxu0 0.0
  %133 = vmatpush1.xpose.msra.mxu0 %v90
  %134 = vmatprep.subr.mxu0 0.0
  %135 = vmatpush1.xpose.msra.mxu0 %v93
  %136 = vmatprep.subr.mxu0 0.0
  %137 = vmatpush1.xpose.msra.mxu0 %v96
  %138 = vmatprep.subr.mxu0 0.0
  %139 = vmatpush1.xpose.msra.mxu0 %v99
  %140 = vmatprep.subr.mxu0 0.0
  %141 = vmatpush1.xpose.msra.mxu0 %v102
  %142 = vmatprep.subr.mxu0 0.0
  %143 = vmatpush1.xpose.msra.mxu0 %v105
  %144 = vmatprep.subr.mxu0 0.0
  %145 = vmatpush1.xpose.msra.mxu0 %v108
  %146 = vmatprep.subr.mxu0 0.0
  %147 = vmatpush1.xpose.msra.mxu0 %v111
  %148 = vmatprep.subr.mxu0 0.0
  %149 = vmatpush1.xpose.msra.mxu0 %v114
  %150 = vmatprep.subr.mxu0 0.0
  %151 = vmatpush1.xpose.msra.mxu0 %v117
  %152 = vmatprep.subr.mxu0 0.0
  %153 = vmatpush1.xpose.msra.mxu0 %v120
  %154 = vmatprep.subr.mxu0 0.0
  %155 = vmatpush1.xpose.msra.mxu0 0.0
  %156 = vmatprep.subr.mxu0 0.0
  %157 = vmatpush1.xpose.msra.mxu0 0.0
  %158 = vmatprep.subr.mxu0 0.0
  %159 = vmatpush1.xpose.msra.mxu0 0.0
  %160 = vmatprep.subr.mxu0 0.0
  %161 = vmatpush1.xpose.msra.mxu0 0.0
  %162 = vmatprep.subr.mxu0 0.0
  %163 = vmatpush1.xpose.msra.mxu0 0.0
  %164 = vmatprep.subr.mxu0 0.0
  %165 = vmatpush1.xpose.msra.mxu0 0.0
  %166 = vmatprep.subr.mxu0 0.0
  %167 = vmatpush1.xpose.msra.mxu0 0.0
  %168 = vmatprep.subr.mxu0 0.0
  %169 = vmatpush1.xpose.msra.mxu0 0.0
  %170 = vmatprep.subr.mxu0 0.0
  %171 = vmatpush1.xpose.msra.mxu0 0.0
  %172 = vmatprep.subr.mxu0 0.0
  %173 = vmatpush1.xpose.msra.mxu0 0.0
  %174 = vmatprep.subr.mxu0 0.0
  %175 = vmatpush1.xpose.msra.mxu0 0.0
  %176 = vmatprep.subr.mxu0 0.0
  %177 = vmatpush1.xpose.msra.mxu0 0.0
  %178 = vmatprep.subr.mxu0 0.0
  %179 = vmatpush1.xpose.msra.mxu0 0.0
  %180 = vmatprep.subr.mxu0 0.0
  %181 = vmatpush1.xpose.msra.mxu0 0.0
  %182 = vmatprep.subr.mxu0 0.0
  %183 = vmatpush1.xpose.msra.mxu0 0.0
  %184 = vmatprep.subr.mxu0 0.0
  %185 = vmatpush1.xpose.msra.mxu0 0.0
  %186 = vmatprep.mubr.f32.mxu0 0.0
  %187 = vmatmul.mubr.f32.gmra.mrb[0].mxu0 %v66
  %v188 = vpop.f32.mrb[0].mxu0
  %v189 = vadd.f32 %v52, %v188
  %v190 = vpop.f32.mrb[0].mxu0
  %191 = vmatprep.mubr.f32.mxu0 0.0
  %192 = vmatmul.mubr.f32.gmra.mrb[0].mxu0 %v69
  %v193 = vpop.f32.mrb[0].mxu0
  %v194 = vadd.f32 %v57, %v193
  %v195 = vpop.f32.mrb[0].mxu0
  %196 = vmatprep.mubr.f32.mxu0 0.0
  %197 = vmatmul.mubr.f32.gmra.mrb[0].mxu0 %v72
  %v198 = vpop.f32.mrb[0].mxu0
  %v199 = vadd.f32 %v62, %v198
  %v200 = vpop.f32.mrb[0].mxu0
  %201 = vdwg.mxu0
  %v202 = vmax.f32 %v189, 0.0
  %v203 = vmax.f32 %v194, 0.0
  %v204 = vmax.f32 %v199, 0.0
  %v205 = vld [vmem:[%s3] sm:$0xff]
  %v206 = vld [vmem:[%s3 + $0x8] sm:$0xff]
  %v207 = vld [vmem:[%s3 + $0x10] sm:$0xff]
  %v208 = vld [vmem:[%s4] sm:$0xff]
  %v209 = vld [vmem:[%s4 + $0x8] sm:$0xff]
  %v210 = vld [vmem:[%s4 + $0x10] sm:$0xff]
  %212 = vset.pattern.permute.xlu0 0
  %213 = vperm.xlu0 %212, %v208
  %v214 = vpop.permute.xlu0 %213
  %217 = vset.pattern.permute.xlu0 0
  %218 = vperm.xlu0 %217, %v209
  %v219 = vpop.permute.xlu0 %218
  %222 = vset.pattern.permute.xlu0 0
  %223 = vperm.xlu0 %222, %v210
  %v224 = vpop.permute.xlu0 %223
  %vm226 = vcmask 195584
  %v228 = vsel %vm226, %v205, 0
  %v231 = vsel %vm226, %v206, 0
  %v234 = vsel %vm226, %v207, 0
  %236 = vmatprep.subr.mxu0 0.0
  %237 = vmatpush1.msra.mxu0 %v202
  %238 = vmatprep.subr.mxu0 0.0
  %239 = vmatpush1.msra.mxu0 %v203
  %240 = vmatprep.subr.mxu0 0.0
  %241 = vmatpush1.msra.mxu0 %v204
  %242 = vmatprep.subr.mxu0 0.0
  %243 = vmatpush1.msra.mxu0 0.0
  %244 = vmatprep.subr.mxu0 0.0
  %245 = vmatpush1.msra.mxu0 0.0
  %246 = vmatprep.subr.mxu0 0.0
  %247 = vmatpush1.msra.mxu0 0.0
  %248 = vmatprep.subr.mxu0 0.0
  %249 = vmatpush1.msra.mxu0 0.0
  %250 = vmatprep.subr.mxu0 0.0
  %251 = vmatpush1.msra.mxu0 0.0
  %252 = vmatprep.subr.mxu0 0.0
  %253 = vmatpush1.msra.mxu0 0.0
  %254 = vmatprep.subr.mxu0 0.0
  %255 = vmatpush1.msra.mxu0 0.0
  %256 = vmatprep.subr.mxu0 0.0
  %257 = vmatpush1.msra.mxu0 0.0
  %258 = vmatprep.subr.mxu0 0.0
  %259 = vmatpush1.msra.mxu0 0.0
  %260 = vmatprep.subr.mxu0 0.0
  %261 = vmatpush1.msra.mxu0 0.0
  %262 = vmatprep.subr.mxu0 0.0
  %263 = vmatpush1.msra.mxu0 0.0
  %264 = vmatprep.subr.mxu0 0.0
  %265 = vmatpush1.msra.mxu0 0.0
  %266 = vmatprep.subr.mxu0 0.0
  %267 = vmatpush1.msra.mxu0 0.0
  %268 = vmatprep.subr.mxu0 0.0
  %269 = vmatpush1.msra.mxu0 0.0
  %270 = vmatprep.subr.mxu0 0.0
  %271 = vmatpush1.msra.mxu0 0.0
  %272 = vmatprep.subr.mxu0 0.0
  %273 = vmatpush1.msra.mxu0 0.0
  %274 = vmatprep.subr.mxu0 0.0
  %275 = vmatpush1.msra.mxu0 0.0
  %276 = vmatprep.subr.mxu0 0.0
  %277 = vmatpush1.msra.mxu0 0.0
  %278 = vmatprep.subr.mxu0 0.0
  %279 = vmatpush1.msra.mxu0 0.0
  %280 = vmatprep.subr.mxu0 0.0
  %281 = vmatpush1.msra.mxu0 0.0
  %282 = vmatprep.subr.mxu0 0.0
  %283 = vmatpush1.msra.mxu0 0.0
  %284 = vmatprep.subr.mxu0 0.0
  %285 = vmatpush1.msra.mxu0 0.0
  %286 = vmatprep.subr.mxu0 0.0
  %287 = vmatpush1.msra.mxu0 0.0
  %288 = vmatprep.subr.mxu0 0.0
  %289 = vmatpush1.msra.mxu0 0.0
  %290 = vmatprep.subr.mxu0 0.0
  %291 = vmatpush1.msra.mxu0 0.0
  %292 = vmatprep.subr.mxu0 0.0
  %293 = vmatpush1.msra.mxu0 0.0
  %294 = vmatprep.subr.mxu0 0.0
  %295 = vmatpush1.msra.mxu0 0.0
  %296 = vmatprep.subr.mxu0 0.0
  %297 = vmatpush1.msra.mxu0 0.0
  %298 = vmatprep.subr.mxu0 0.0
  %299 = vmatpush1.msra.mxu0 0.0
  %300 = vmatprep.mubr.f32.mxu0 0.0
  %301 = vmatmul.mubr.f32.gmra.mrb[0].mxu0 %v228
  %v302 = vpop.f32.mrb[0].mxu0
  %v303 = vadd.f32 %v214, %v302
  %v304 = vpop.f32.mrb[0].mxu0
  %305 = vmatprep.mubr.f32.mxu0 0.0
  %306 = vmatmul.mubr.f32.gmra.mrb[0].mxu0 %v231
  %v307 = vpop.f32.mrb[0].mxu0
  %v308 = vadd.f32 %v219, %v307
  %v309 = vpop.f32.mrb[0].mxu0
  %310 = vmatprep.mubr.f32.mxu0 0.0
  %311 = vmatmul.mubr.f32.gmra.mrb[0].mxu0 %v234
  %v312 = vpop.f32.mrb[0].mxu0
  %v313 = vadd.f32 %v224, %v312
  %v314 = vpop.f32.mrb[0].mxu0
  %315 = vdwg.mxu0
  %v316 = vmax.f32 %v303, 0.0
  %v317 = vmax.f32 %v308, 0.0
  %v318 = vmax.f32 %v313, 0.0
  %v319 = vld [vmem:[%s5] sm:$0xff]
  %v320 = vld [vmem:[%s5 + $0x8] sm:$0xff]
  %v321 = vld [vmem:[%s5 + $0x10] sm:$0xff]
  %323 = vset.pattern.permute.xlu0 0
  %324 = vperm.xlu0 %323, %v319
  %v325 = vpop.permute.xlu0 %324
  %328 = vset.pattern.permute.xlu0 0
  %329 = vperm.xlu0 %328, %v320
  %v330 = vpop.permute.xlu0 %329
  %333 = vset.pattern.permute.xlu0 0
  %334 = vperm.xlu0 %333, %v321
  %v335 = vpop.permute.xlu0 %334
  %v337 = vmul.f32 %v316, %v325
  %v338 = vmul.f32 %v317, %v330
  %v339 = vmul.f32 %v318, %v335
  %v340 = vadd.f32 %v337, %v338
  %v341 = vadd.f32 %v340, %v339
  %v342 = vrot.slane %v341, 4
  %v343 = vadd.f32 %v341, %v342
  %v344 = vrot.slane %v343, 2
  %v345 = vadd.f32 %v343, %v344
  %v346 = vrot.slane %v345, 1
  %v347 = vadd.f32 %v345, %v346
  %s348 = sld [smem:[#allocation2]]
  %v349 = vstv %s348
  %v350 = vadd.f32 %v347, %v349
  %351 = vst [vmem:[%s7] sm:$0x1] %v350
  // Predicated region
  $region30: #{critic_forward.1} parent=0 // pred_check
    _
  $region31: #{critic_forward.1} parent=0 // pred_check_branch
    %353 = sbr.rel (0) target = $region33
  $region32: #{critic_forward.1} parent=0 // pred_region
    _
  $region33: #{critic_forward.1} parent=0 // pred_fallthru
    _
  // Predicated region
  $region34: #{critic_forward.1} parent=0 // pred_check
    _
  $region35: #{critic_forward.1} parent=0 // pred_check_branch
    %355 = sbr.rel (0) target = $region37
  $region36: #{critic_forward.1} parent=0 // pred_region
    _
  $region37: #{critic_forward.1} parent=0 // pred_fallthru
    _

</llo_original>
